<compile_context>
chip_gen: v5e
topology: v5e:2x2
jax: 0.10.0
libtpu: 0.0.40
codegen_flags: <defaults>
</compile_context>

<pallas_src>
import functools
import math

import jax
import jax.numpy as jnp
from jax import lax
from jax.experimental import pallas as pl
from jax.experimental.pallas import tpu as pltpu


def _make_sdpa_kernel(inv_temp: float, with_dropout: bool):
    """Builds the fused SDPA kernel body (optionally consuming a dropout mask)."""

    def kernel(*refs):
        if with_dropout:
            q_ref, k_ref, v_ref, mask_ref, out_ref, attn_ref, logattn_ref = refs
        else:
            q_ref, k_ref, v_ref, out_ref, attn_ref, logattn_ref = refs
            mask_ref = None

        # q_ref: (TQ, D), k_ref: (Lk, D), v_ref: (Lk, Dv) -- batch dim squeezed.
        # scores = q @ k^T / temperature  (contract last dims; no explicit transpose)
        s = lax.dot_general(
            q_ref[...], k_ref[...],
            dimension_numbers=(((1,), (1,)), ((), ())),
            preferred_element_type=jnp.float32,
        ) * jnp.float32(inv_temp)

        # numerically stable softmax / log_softmax along the full Lk axis
        m = jnp.max(s, axis=-1, keepdims=True)
        z = s - m
        e = jnp.exp(z)
        l = jnp.sum(e, axis=-1, keepdims=True)
        attn = e / l
        logattn_ref[...] = (z - jnp.log(l)).astype(logattn_ref.dtype)

        if with_dropout:
            # mask already holds {0, 1/(1-p)} (inverted dropout), same dtype as attn out
            attn = attn * mask_ref[...].astype(jnp.float32)

        attn_ref[...] = attn.astype(attn_ref.dtype)

        # output = attn @ v
        out_ref[...] = jnp.dot(
            attn.astype(v_ref.dtype), v_ref[...],
            preferred_element_type=jnp.float32,
        ).astype(out_ref.dtype)

    return kernel


def scaled_dot_product_attention(q, k, v, temperature, *, attn_dropout=0.1,
                                 training=False, dropout_rng=None, block_q=None):
    """q: (B, Lq, D), k: (B, Lk, D), v: (B, Lk, Dv). Returns (output, attn, log_attn)."""
    B, Lq, D = q.shape
    Bk, Lk, Dk = k.shape
    Bv, Lkv, Dv = v.shape
    assert Bk == B and Bv == B and Dk == D and Lkv == Lk

    # Keep the softmax axis whole; tile the q rows so VMEM stays bounded on all
    # generations (v7x has only 64 MiB physical / 32 MiB scoped per TensorCore).
    if block_q is None:
        block_q = Lq if Lq <= 512 else 512
    grid = (B, pl.cdiv(Lq, block_q))
    inv_temp = float(1.0 / float(temperature))

    out_shape = (
        jax.ShapeDtypeStruct((B, Lq, Dv), q.dtype),   # output
        jax.ShapeDtypeStruct((B, Lq, Lk), q.dtype),   # attn (post-dropout)
        jax.ShapeDtypeStruct((B, Lq, Lk), q.dtype),   # log_attn
    )

    # Leading batch dim squeezed (None) -> 2-D refs inside the kernel.
    q_spec = pl.BlockSpec((None, block_q, D), lambda b, i: (b, i, 0))
    k_spec = pl.BlockSpec((None, Lk, D), lambda b, i: (b, 0, 0))
    v_spec = pl.BlockSpec((None, Lk, Dv), lambda b, i: (b, 0, 0))
    out_spec = pl.BlockSpec((None, block_q, Dv), lambda b, i: (b, i, 0))
    attn_spec = pl.BlockSpec((None, block_q, Lk), lambda b, i: (b, i, 0))

    compiler_params = pltpu.CompilerParams(
        dimension_semantics=("parallel", "parallel"),
        vmem_limit_bytes=32 * 1024 * 1024,   # raises v5e's 16 MiB default; safe on v6e/v7x
    )

    use_dropout = bool(training) and float(attn_dropout) > 0.0
    kernel = _make_sdpa_kernel(inv_temp, use_dropout)

    if use_dropout:
        if dropout_rng is None:
            dropout_rng = jax.random.PRNGKey(0)
        keep = jax.random.bernoulli(dropout_rng, 1.0 - float(attn_dropout), (B, Lq, Lk))
        mask = keep.astype(q.dtype) * jnp.asarray(1.0 / (1.0 - float(attn_dropout)), q.dtype)
        return pl.pallas_call(
            kernel,
            out_shape=out_shape,
            grid=grid,
            in_specs=[q_spec, k_spec, v_spec, attn_spec],
            out_specs=(out_spec, attn_spec, attn_spec),
            compiler_params=compiler_params,
        )(q, k, v, mask)

    return pl.pallas_call(
        kernel,
        out_shape=out_shape,
        grid=grid,
        in_specs=[q_spec, k_spec, v_spec],
        out_specs=(out_spec, attn_spec, attn_spec),
        compiler_params=compiler_params,
    )(q, k, v)


if __name__ == "__main__":
    B, Lq, Lk, D, Dv = 2, 8, 8, 32, 32
    temperature = math.sqrt(D)
    dropout_p = 0.1

    key = jax.random.PRNGKey(0)
    kq, kk, kv = jax.random.split(key, 3)
    q = jax.random.normal(kq, (B, Lq, D), dtype=jnp.float32)
    k = jax.random.normal(kk, (B, Lk, D), dtype=jnp.float32)
    v = jax.random.normal(kv, (B, Lk, Dv), dtype=jnp.float32)

    # ---- eval mode (dropout = identity): check against pure-JAX reference ----
    out, attn, log_attn = jax.block_until_ready(
        scaled_dot_product_attention(q, k, v, temperature,
                                     attn_dropout=dropout_p, training=False))

    s_ref = jnp.einsum("bqd,bkd->bqk", q, k) / temperature
    attn_ref = jax.nn.softmax(s_ref, axis=2)
    log_attn_ref = jax.nn.log_softmax(s_ref, axis=2)
    out_ref = jnp.einsum("bqk,bkd->bqd", attn_ref, v)

    assert out.shape == (B, Lq, Dv) and attn.shape == (B, Lq, Lk) and log_attn.shape == (B, Lq, Lk)
    assert jnp.allclose(out, out_ref, atol=1e-5, rtol=1e-5), "eval output mismatch"
    assert jnp.allclose(attn, attn_ref, atol=1e-5, rtol=1e-5), "eval attn mismatch"
    assert jnp.allclose(log_attn, log_attn_ref, atol=1e-5, rtol=1e-5), "eval log_attn mismatch"

    # ---- training mode (inverted dropout via host-generated mask) ----
    drop_key = jax.random.PRNGKey(123)
    out_t, attn_t, log_attn_t = jax.block_until_ready(
        scaled_dot_product_attention(q, k, v, temperature,
                                     attn_dropout=dropout_p, training=True,
                                     dropout_rng=drop_key))

    keep = jax.random.bernoulli(drop_key, 1.0 - dropout_p, (B, Lq, Lk)).astype(jnp.float32)
    mask = keep * (1.0 / (1.0 - dropout_p))
    attn_t_ref = attn_ref * mask
    out_t_ref = jnp.einsum("bqk,bkd->bqd", attn_t_ref, v)

    assert jnp.allclose(out_t, out_t_ref, atol=1e-5, rtol=1e-5), "train output mismatch"
    assert jnp.allclose(attn_t, attn_t_ref, atol=1e-5, rtol=1e-5), "train attn mismatch"
    assert jnp.allclose(log_attn_t, log_attn_ref, atol=1e-5, rtol=1e-5), "train log_attn mismatch"

    print("KERNEL_OK")
</pallas_src>

<mosaic_0001>
module attributes {stable_mosaic.version = 11 : i64} {
  func.func @kernel(%arg0: i32, %arg1: i32, %arg2: memref<1x8x32xf32, #tpu.memory_space<vmem>>, %arg3: memref<1x8x32xf32, #tpu.memory_space<vmem>>, %arg4: memref<1x8x32xf32, #tpu.memory_space<vmem>>, %arg5: memref<1x8x32xf32, #tpu.memory_space<vmem>>, %arg6: memref<1x8x8xf32, #tpu.memory_space<vmem>>, %arg7: memref<1x8x8xf32, #tpu.memory_space<vmem>>) attributes {dimension_semantics = [#tpu.dimension_semantics<parallel>, #tpu.dimension_semantics<parallel>], iteration_bounds = array<i64: 2, 1>, scalar_prefetch = 0 : i64, scratch_operands = 0 : i64, tpu.core_type = #tpu.core_type<tc>, window_params = [{transform_indices = @transform_0, window_bounds = array<i64: 1, 8, 32>}, {transform_indices = @transform_1, window_bounds = array<i64: 1, 8, 32>}, {transform_indices = @transform_2, window_bounds = array<i64: 1, 8, 32>}, {transform_indices = @transform_3, window_bounds = array<i64: 1, 8, 32>}, {transform_indices = @transform_4, window_bounds = array<i64: 1, 8, 8>}, {transform_indices = @transform_5, window_bounds = array<i64: 1, 8, 8>}]} {
    %c0 = arith.constant 0 : index
    %c0_0 = arith.constant 0 : index
    %c0_1 = arith.constant 0 : index
    %0 = vector.load %arg2[%c0, %c0_0, %c0_1] : memref<1x8x32xf32, #tpu.memory_space<vmem>>, vector<1x8x32xf32>
    %1 = vector.shape_cast %0 : vector<1x8x32xf32> to vector<8x32xf32>
    %c0_2 = arith.constant 0 : index
    %c0_3 = arith.constant 0 : index
    %c0_4 = arith.constant 0 : index
    %2 = vector.load %arg3[%c0_2, %c0_3, %c0_4] : memref<1x8x32xf32, #tpu.memory_space<vmem>>, vector<1x8x32xf32>
    %3 = vector.shape_cast %2 : vector<1x8x32xf32> to vector<8x32xf32>
    %cst = arith.constant dense<0.000000e+00> : vector<8x8xf32>
    %4 = tpu.matmul %1, %3, %cst {dimension_numbers = #tpu.dot_dimension_numbers<[1], [1], [0], [0], [0, 0, 1, 0], [], []>} : vector<8x32xf32>, vector<8x32xf32>, vector<8x8xf32> -> vector<8x8xf32>
    %cst_5 = arith.constant 0.176776692 : f32
    %5 = vector.broadcast %cst_5 : f32 to vector<8x8xf32>
    %6 = arith.mulf %4, %5 : vector<8x8xf32>
    %cst_6 = arith.constant dense<0xFF800000> : vector<8xf32>
    %7 = vector.multi_reduction <maximumf>, %6, %cst_6 [1] : vector<8x8xf32> to vector<8xf32>
    %8 = vector.shape_cast %7 : vector<8xf32> to vector<8x1xf32>
    %9 = vector.broadcast %8 : vector<8x1xf32> to vector<8x8xf32>
    %10 = arith.subf %6, %9 : vector<8x8xf32>
    %11 = math.exp %10 : vector<8x8xf32>
    %cst_7 = arith.constant dense<0.000000e+00> : vector<8xf32>
    %12 = vector.multi_reduction <add>, %11, %cst_7 [1] : vector<8x8xf32> to vector<8xf32>
    %13 = vector.shape_cast %12 : vector<8xf32> to vector<8x1xf32>
    %14 = vector.broadcast %13 : vector<8x1xf32> to vector<8x8xf32>
    %15 = arith.divf %11, %14 : vector<8x8xf32>
    %16 = math.log %13 : vector<8x1xf32>
    %17 = vector.broadcast %16 : vector<8x1xf32> to vector<8x8xf32>
    %18 = arith.subf %10, %17 : vector<8x8xf32>
    %c0_8 = arith.constant 0 : index
    %c0_9 = arith.constant 0 : index
    %c0_10 = arith.constant 0 : index
    %19 = vector.load %arg7[%c0_8, %c0_9, %c0_10] : memref<1x8x8xf32, #tpu.memory_space<vmem>>, vector<1x8x8xf32>
    %20 = vector.shape_cast %19 : vector<1x8x8xf32> to vector<8x8xf32>
    %21 = vector.shape_cast %18 : vector<8x8xf32> to vector<1x8x8xf32>
    tpu.vector_store %arg7[%c0_8, %c0_9, %c0_10], %21 {strides = array<i32>} : memref<1x8x8xf32, #tpu.memory_space<vmem>>, vector<1x8x8xf32>,
    %c0_11 = arith.constant 0 : index
    %c0_12 = arith.constant 0 : index
    %c0_13 = arith.constant 0 : index
    %22 = vector.load %arg6[%c0_11, %c0_12, %c0_13] : memref<1x8x8xf32, #tpu.memory_space<vmem>>, vector<1x8x8xf32>
    %23 = vector.shape_cast %22 : vector<1x8x8xf32> to vector<8x8xf32>
    %24 = vector.shape_cast %15 : vector<8x8xf32> to vector<1x8x8xf32>
    tpu.vector_store %arg6[%c0_11, %c0_12, %c0_13], %24 {strides = array<i32>} : memref<1x8x8xf32, #tpu.memory_space<vmem>>, vector<1x8x8xf32>,
    %c0_14 = arith.constant 0 : index
    %c0_15 = arith.constant 0 : index
    %c0_16 = arith.constant 0 : index
    %25 = vector.load %arg4[%c0_14, %c0_15, %c0_16] : memref<1x8x32xf32, #tpu.memory_space<vmem>>, vector<1x8x32xf32>
    %26 = vector.shape_cast %25 : vector<1x8x32xf32> to vector<8x32xf32>
    %cst_17 = arith.constant dense<0.000000e+00> : vector<8x32xf32>
    %27 = tpu.matmul %15, %26, %cst_17 {dimension_numbers = #tpu.dot_dimension_numbers<[1], [0], [0], [1], [0, 0, 1, 1], [], []>} : vector<8x8xf32>, vector<8x32xf32>, vector<8x32xf32> -> vector<8x32xf32>
    %c0_18 = arith.constant 0 : index
    %c0_19 = arith.constant 0 : index
    %c0_20 = arith.constant 0 : index
    %28 = vector.load %arg5[%c0_18, %c0_19, %c0_20] : memref<1x8x32xf32, #tpu.memory_space<vmem>>, vector<1x8x32xf32>
    %29 = vector.shape_cast %28 : vector<1x8x32xf32> to vector<8x32xf32>
    %30 = vector.shape_cast %27 : vector<8x32xf32> to vector<1x8x32xf32>
    tpu.vector_store %arg5[%c0_18, %c0_19, %c0_20], %30 {strides = array<i32>} : memref<1x8x32xf32, #tpu.memory_space<vmem>>, vector<1x8x32xf32>,
    return
  }
  func.func @transform_0(%arg0: i32, %arg1: i32) -> (i32, i32, i32) {
    %c0_i32 = arith.constant 0 : i32
    %c0_i32_0 = arith.constant 0 : i32
    return %arg0, %arg1, %c0_i32 : i32, i32, i32
  }
  func.func @transform_1(%arg0: i32, %arg1: i32) -> (i32, i32, i32) {
    %c0_i32 = arith.constant 0 : i32
    %c0_i32_0 = arith.constant 0 : i32
    %c0_i32_1 = arith.constant 0 : i32
    return %arg0, %c0_i32, %c0_i32_0 : i32, i32, i32
  }
  func.func @transform_2(%arg0: i32, %arg1: i32) -> (i32, i32, i32) {
    %c0_i32 = arith.constant 0 : i32
    %c0_i32_0 = arith.constant 0 : i32
    %c0_i32_1 = arith.constant 0 : i32
    return %arg0, %c0_i32, %c0_i32_0 : i32, i32, i32
  }
  func.func @transform_3(%arg0: i32, %arg1: i32) -> (i32, i32, i32) {
    %c0_i32 = arith.constant 0 : i32
    %c0_i32_0 = arith.constant 0 : i32
    return %arg0, %arg1, %c0_i32 : i32, i32, i32
  }
  func.func @transform_4(%arg0: i32, %arg1: i32) -> (i32, i32, i32) {
    %c0_i32 = arith.constant 0 : i32
    %c0_i32_0 = arith.constant 0 : i32
    return %arg0, %arg1, %c0_i32 : i32, i32, i32
  }
  func.func @transform_5(%arg0: i32, %arg1: i32) -> (i32, i32, i32) {
    %c0_i32 = arith.constant 0 : i32
    %c0_i32_0 = arith.constant 0 : i32
    return %arg0, %arg1, %c0_i32 : i32, i32, i32
  }
}

</mosaic_0001>

<llo_original>
// kernel: tpu_custom_call.1
$region0: #{tpu_custom_call.1}
  #allocation0 [shape = 'u32[]', space=smem, size = 0x4, offset = 0x4, fixed_abs, tag = 'smem constant byte address 0x4 - core index']
  #allocation1 [shape = 'u32[72,128]{1,0:T(1,128)}', space=vmem, size = 0x9000, scoped, tag = 'internal scratch']
  %s0 = inlined_call_operand.hbm [shape: f32[2,8,32], index: 0, kind: input, shape index: {}]
  %s1 = inlined_call_operand.hbm [shape: f32[2,8,32], index: 1, kind: input, shape index: {}]
  %s2 = inlined_call_operand.hbm [shape: f32[2,8,32], index: 2, kind: input, shape index: {}]
  %s3 = inlined_call_operand.hbm [shape: f32[2,8,32], index: 3, kind: output, shape index: {0}]
  %s4 = inlined_call_operand.hbm [shape: f32[2,8,8], index: 4, kind: output, shape index: {1}]
  %s5 = inlined_call_operand.hbm [shape: f32[2,8,8], index: 5, kind: output, shape index: {2}]
  %6 = xla_tuple %s3, %s4, %s5
  %s7 = sld [smem:[#allocation0]]
  $region73: #{tpu_custom_call.1} parent=0
    _
  %s9 = ssub.s32 1, %s7
  %s10 = scalar_select 0, %s9, %s7
  $region1: #{tpu_custom_call.1} parent=0
    #allocation2 [shape = 'u8[8192]{0}', space=vmem, size = 0x2000, scoped, tag = 'input window, operand 0']
    #allocation3 [shape = 's32[2]{0}', space=sflag, size = 0x8, scoped, tag = 'scoped memory for tpu_custom_call.1']
    #allocation4 [shape = 's32[2]{0}', space=sflag, size = 0x8, scoped, tag = 'scoped memory for tpu_custom_call.1']
    #allocation5 [shape = 'u8[8192]{0}', space=vmem, size = 0x2000, scoped, tag = 'input window, operand 1']
    #allocation6 [shape = 's32[2]{0}', space=sflag, size = 0x8, scoped, tag = 'scoped memory for tpu_custom_call.1']
    #allocation7 [shape = 'u8[8192]{0}', space=vmem, size = 0x2000, scoped, tag = 'input window, operand 2']
    #allocation8 [shape = 'u8[8192]{0}', space=vmem, size = 0x2000, scoped, tag = 'output window, operand 0']
    #allocation9 [shape = 'u8[8192]{0}', space=vmem, size = 0x2000, scoped, tag = 'output window, operand 1']
    #allocation10 [shape = 's32[2]{0}', space=sflag, size = 0x8, scoped, tag = 'scoped memory for tpu_custom_call.1']
    #allocation11 [shape = 'u8[8192]{0}', space=vmem, size = 0x2000, scoped, tag = 'output window, operand 2']
    %11 = vsyncpa [#allocation3], 0
    %s12 = scalar_lea.sflag [#allocation3], 1
    %13 = vsyncpa %s12, 0
    %14 = vsyncpa [#allocation6], 0
    %s15 = scalar_lea.sflag [#allocation6], 1
    %16 = vsyncpa %s15, 0
    %17 = vsyncpa [#allocation4], 0
    %s18 = scalar_lea.sflag [#allocation4], 1
    %19 = vsyncpa %s18, 0
    %20 = vsyncpa [#allocation10], 0
    %s21 = scalar_lea.sflag [#allocation10], 1
    %22 = vsyncpa %s21, 0
    loop: start=0, step=1, limit=4
    $region2: #{tpu_custom_call.1} parent=1 // loop_pre_header
      _
    $region3: #{tpu_custom_call.1} parent=1 // loop_header
      %s24 = sphi 0, %s28
      %p25 = scmp.ge.s32.totalorder %s24, 4
      %s31 = sphi 0, %s43
      %s32 = sphi 0, %s39
      %s33 = sphi 0, %s31
      %s34 = sphi 0, %s32
      %s35 = sphi 0, %s33
      %s36 = sphi 0, %s34
      %s48 = sphi 0, %s50
      %s51 = sphi 0, %s48
      %s52 = sphi 0, %s51
      %s68 = sphi 0, %s52
      %s74 = sphi 0, %s76
      %s77 = sphi 0, %s74
      %s78 = sphi 0, %s77
      %s94 = sphi 0, %s78
      %s100 = sphi 0, %s102
      %s103 = sphi 0, %s100
      %s104 = sphi 0, %s103
      %s120 = sphi 0, %s104
      %s128 = sphi 0, %s130
      %s131 = sphi 0, %s128
      %s132 = sphi 0, %s131
      %s148 = sphi 0, %s132
      %s156 = sphi 0, %s158
      %s159 = sphi 0, %s156
      %s160 = sphi 0, %s159
      %s176 = sphi 0, %s160
      %s184 = sphi 0, %s186
      %s187 = sphi 0, %s184
      %s188 = sphi 0, %s187
      %s204 = sphi 0, %s188
    $region4: #{tpu_custom_call.1} parent=1 // loop_header_branch
      %27 = sbr.rel (%p25) target = $region8
    $region5: #{tpu_custom_call.1} parent=1 // loop_body
      %s29 = ssub.s32 %s24, 1
      %s30 = ssub.s32 %s24, 2
      %s37 = sadd.s32 1, %s32
      %p38 = scmp.ge.s32.totalorder %s37, 1
      %s39 = scalar_select %p38, 0, %s37
      %s40 = sadd.s32 1, %s31
      %s41 = scalar_select %p38, %s40, %s31
      %p42 = scmp.ge.s32.totalorder %s41, 2
      %s43 = scalar_select %p42, 0, %s41
      %s44 = ssub.s32 %s31, %s43
      %s45 = ssub.s32 %s32, %s39
      %s46 = sor.u32 %s44, %s45
      %p47 = scmp.eq.s32.totalorder %s46, 0
      %s49 = sadd.s32 %s48, 1
      %s50 = scalar_select %p47, %s48, %s49
      %p53 = pneg %p47
      %p54 = scmp.eq.s32.totalorder %s24, 1
      %p55 = por %p53, %p54
      %p56 = scmp.ne.s32.totalorder %s48, %s51
      %p57 = scmp.eq.s32.totalorder %s24, 0
      %p58 = por %p56, %p57
      %p59 = scmp.ne.s32.totalorder %s48, %s51
      %p60 = scmp.eq.s32.totalorder %s29, 1
      %p61 = por %p59, %p60
      %p62 = scmp.ne.s32.totalorder %s51, %s52
      %p63 = scmp.eq.s32.totalorder %s29, 0
      %p64 = por %p62, %p63
      %p65 = scmp.ne.s32.totalorder %s51, %s52
      %p66 = scmp.eq.s32.totalorder %s30, 1
      %p67 = por %p65, %p66
      %p69 = scmp.ne.s32.totalorder %s52, %s68
      %p70 = scmp.eq.s32.totalorder %s30, 0
      %p71 = por %p69, %p70
      %s72 = ssub.s32 %s31, %s43
      %p73 = scmp.eq.s32.totalorder %s72, 0
      %s75 = sadd.s32 %s74, 1
      %s76 = scalar_select %p73, %s74, %s75
      %p79 = pneg %p73
      %p80 = scmp.eq.s32.totalorder %s24, 1
      %p81 = por %p79, %p80
      %p82 = scmp.ne.s32.totalorder %s74, %s77
      %p83 = scmp.eq.s32.totalorder %s24, 0
      %p84 = por %p82, %p83
      %p85 = scmp.ne.s32.totalorder %s74, %s77
      %p86 = scmp.eq.s32.totalorder %s29, 1
      %p87 = por %p85, %p86
      %p88 = scmp.ne.s32.totalorder %s77, %s78
      %p89 = scmp.eq.s32.totalorder %s29, 0
      %p90 = por %p88, %p89
      %p91 = scmp.ne.s32.totalorder %s77, %s78
      %p92 = scmp.eq.s32.totalorder %s30, 1
      %p93 = por %p91, %p92
      %p95 = scmp.ne.s32.totalorder %s78, %s94
      %p96 = scmp.eq.s32.totalorder %s30, 0
      %p97 = por %p95, %p96
      %s98 = ssub.s32 %s31, %s43
      %p99 = scmp.eq.s32.totalorder %s98, 0
      %s101 = sadd.s32 %s100, 1
      %s102 = scalar_select %p99, %s100, %s101
      %p105 = pneg %p99
      %p106 = scmp.eq.s32.totalorder %s24, 1
      %p107 = por %p105, %p106
      %p108 = scmp.ne.s32.totalorder %s100, %s103
      %p109 = scmp.eq.s32.totalorder %s24, 0
      %p110 = por %p108, %p109
      %p111 = scmp.ne.s32.totalorder %s100, %s103
      %p112 = scmp.eq.s32.totalorder %s29, 1
      %p113 = por %p111, %p112
      %p114 = scmp.ne.s32.totalorder %s103, %s104
      %p115 = scmp.eq.s32.totalorder %s29, 0
      %p116 = por %p114, %p115
      %p117 = scmp.ne.s32.totalorder %s103, %s104
      %p118 = scmp.eq.s32.totalorder %s30, 1
      %p119 = por %p117, %p118
      %p121 = scmp.ne.s32.totalorder %s104, %s120
      %p122 = scmp.eq.s32.totalorder %s30, 0
      %p123 = por %p121, %p122
      %s124 = ssub.s32 %s31, %s43
      %s125 = ssub.s32 %s32, %s39
      %s126 = sor.u32 %s124, %s125
      %p127 = scmp.eq.s32.totalorder %s126, 0
      %s129 = sadd.s32 %s128, 1
      %s130 = scalar_select %p127, %s128, %s129
      %p133 = pneg %p127
      %p134 = scmp.eq.s32.totalorder %s24, 1
      %p135 = por %p133, %p134
      %p136 = scmp.ne.s32.totalorder %s128, %s131
      %p137 = scmp.eq.s32.totalorder %s24, 0
      %p138 = por %p136, %p137
      %p139 = scmp.ne.s32.totalorder %s128, %s131
      %p140 = scmp.eq.s32.totalorder %s29, 1
      %p141 = por %p139, %p140
      %p142 = scmp.ne.s32.totalorder %s131, %s132
      %p143 = scmp.eq.s32.totalorder %s29, 0
      %p144 = por %p142, %p143
      %p145 = scmp.ne.s32.totalorder %s131, %s132
      %p146 = scmp.eq.s32.totalorder %s30, 1
      %p147 = por %p145, %p146
      %p149 = scmp.ne.s32.totalorder %s132, %s148
      %p150 = scmp.eq.s32.totalorder %s30, 0
      %p151 = por %p149, %p150
      %s152 = ssub.s32 %s31, %s43
      %s153 = ssub.s32 %s32, %s39
      %s154 = sor.u32 %s152, %s153
      %p155 = scmp.eq.s32.totalorder %s154, 0
      %s157 = sadd.s32 %s156, 1
      %s158 = scalar_select %p155, %s156, %s157
      %p161 = pneg %p155
      %p162 = scmp.eq.s32.totalorder %s24, 1
      %p163 = por %p161, %p162
      %p164 = scmp.ne.s32.totalorder %s156, %s159
      %p165 = scmp.eq.s32.totalorder %s24, 0
      %p166 = por %p164, %p165
      %p167 = scmp.ne.s32.totalorder %s156, %s159
      %p168 = scmp.eq.s32.totalorder %s29, 1
      %p169 = por %p167, %p168
      %p170 = scmp.ne.s32.totalorder %s159, %s160
      %p171 = scmp.eq.s32.totalorder %s29, 0
      %p172 = por %p170, %p171
      %p173 = scmp.ne.s32.totalorder %s159, %s160
      %p174 = scmp.eq.s32.totalorder %s30, 1
      %p175 = por %p173, %p174
      %p177 = scmp.ne.s32.totalorder %s160, %s176
      %p178 = scmp.eq.s32.totalorder %s30, 0
      %p179 = por %p177, %p178
      %s180 = ssub.s32 %s31, %s43
      %s181 = ssub.s32 %s32, %s39
      %s182 = sor.u32 %s180, %s181
      %p183 = scmp.eq.s32.totalorder %s182, 0
      %s185 = sadd.s32 %s184, 1
      %s186 = scalar_select %p183, %s184, %s185
      %p189 = pneg %p183
      %p190 = scmp.eq.s32.totalorder %s24, 1
      %p191 = por %p189, %p190
      %p192 = scmp.ne.s32.totalorder %s184, %s187
      %p193 = scmp.eq.s32.totalorder %s24, 0
      %p194 = por %p192, %p193
      %p195 = scmp.ne.s32.totalorder %s184, %s187
      %p196 = scmp.eq.s32.totalorder %s29, 1
      %p197 = por %p195, %p196
      %p198 = scmp.ne.s32.totalorder %s187, %s188
      %p199 = scmp.eq.s32.totalorder %s29, 0
      %p200 = por %p198, %p199
      %p201 = scmp.ne.s32.totalorder %s187, %s188
      %p202 = scmp.eq.s32.totalorder %s30, 1
      %p203 = por %p201, %p202
      %p205 = scmp.ne.s32.totalorder %s188, %s204
      %p206 = scmp.eq.s32.totalorder %s30, 0
      %p207 = por %p205, %p206
      %p208 = scmp.le.s32.totalorder 1, %s24
      %p209 = scmp.lt.s32.totalorder %s24, 3
      %p210 = pnand %p208, %p209
      %p211 = pneg %p210
      // Predicated region
      $region9: #{tpu_custom_call.1} parent=5 // pred_check
        _
      $region10: #{tpu_custom_call.1} parent=5 // pred_check_branch
        %213 = sbr.rel (%p210) target = $region12
      $region11: #{tpu_custom_call.1} parent=5 // pred_region
        %s214 = ssub.s32 %s24, 1
      $region12: #{tpu_custom_call.1} parent=5 // pred_fallthru
        _
      %p215 = scmp.lt.s32.totalorder %s24, 2
      // Predicated region
      $region13: #{tpu_custom_call.1} parent=5 // pred_check
        %p216 = pneg %p215
      $region14: #{tpu_custom_call.1} parent=5 // pred_check_branch
        %218 = sbr.rel (%p216) target = $region16
      $region15: #{tpu_custom_call.1} parent=5 // pred_region
        // Predicated region
        $region17: #{tpu_custom_call.1} parent=15 // pred_check
          %p219 = pneg %p58
        $region18: #{tpu_custom_call.1} parent=15 // pred_check_branch
          %221 = sbr.rel (%p219) target = $region20
        $region19: #{tpu_custom_call.1} parent=15 // pred_region
          %s222 = sand.u32 %s48, 1
          %s223 = scalar_lea.sflag [#allocation3], %s222
          %s224 = sand.u32 %s48, 1
          %s225 = smul.addr %s224, 8
          %s226 = scalar_lea.vmem [#allocation2], %s225
          %228 = vsyncadd %s223, 0
          %s229 = sadd.s32 %s32, %s31
          %s230 = smul.addr %s229, 8
          %s231 = scalar_lea.hbm %s0, %s230
          %s233 = sshll.u32 %s231, 4
          %s234 = int_to_ptr.hbm [resolvable:$true] %s233
          %s235 = sshll.u32 %s226, 4
          %s236 = int_to_ptr.vmem [resolvable:$true] %s235
          %238 = dma.hbm_to_vmem [thread:$0]  %s234, 128, %s236, %s223
        $region20: #{tpu_custom_call.1} parent=15 // pred_fallthru
          _
        // Predicated region
        $region21: #{tpu_custom_call.1} parent=15 // pred_check
          %p239 = pneg %p84
        $region22: #{tpu_custom_call.1} parent=15 // pred_check_branch
          %241 = sbr.rel (%p239) target = $region24
        $region23: #{tpu_custom_call.1} parent=15 // pred_region
          %s242 = sand.u32 %s24, 1
          %s243 = scalar_lea.sflag [#allocation6], %s242
          %s244 = sand.u32 %s74, 1
          %s245 = smul.addr %s244, 8
          %s246 = scalar_lea.vmem [#allocation5], %s245
          %248 = vsyncadd %s243, 0
          %s249 = smul.addr %s31, 8
          %s250 = scalar_lea.hbm %s1, %s249
          %s252 = sshll.u32 %s250, 4
          %s253 = int_to_ptr.hbm [resolvable:$true] %s252
          %s254 = sshll.u32 %s246, 4
          %s255 = int_to_ptr.vmem [resolvable:$true] %s254
          %257 = dma.hbm_to_vmem [thread:$0]  %s253, 128, %s255, %s243
        $region24: #{tpu_custom_call.1} parent=15 // pred_fallthru
          _
        // Predicated region
        $region25: #{tpu_custom_call.1} parent=15 // pred_check
          %p258 = pneg %p110
        $region26: #{tpu_custom_call.1} parent=15 // pred_check_branch
          %260 = sbr.rel (%p258) target = $region28
        $region27: #{tpu_custom_call.1} parent=15 // pred_region
          %s261 = sand.u32 %s24, 1
          %s262 = scalar_lea.sflag [#allocation6], %s261
          %s263 = sand.u32 %s100, 1
          %s264 = smul.addr %s263, 8
          %s265 = scalar_lea.vmem [#allocation7], %s264
          %267 = vsyncadd %s262, 0
          %s268 = smul.addr %s31, 8
          %s269 = scalar_lea.hbm %s2, %s268
          %s271 = sshll.u32 %s269, 4
          %s272 = int_to_ptr.hbm [resolvable:$true] %s271
          %s273 = sshll.u32 %s265, 4
          %s274 = int_to_ptr.vmem [resolvable:$true] %s273
          %276 = dma.hbm_to_vmem [thread:$0]  %s272, 128, %s274, %s262
        $region28: #{tpu_custom_call.1} parent=15 // pred_fallthru
          _
      $region16: #{tpu_custom_call.1} parent=5 // pred_fallthru
        _
      %p277 = scmp.le.s32.totalorder 1, %s24
      %p278 = scmp.lt.s32.totalorder %s24, 3
      %p279 = pnand %p277, %p278
      %p280 = pneg %p279
      // Predicated region
      $region29: #{tpu_custom_call.1} parent=5 // pred_check
        _
      $region30: #{tpu_custom_call.1} parent=5 // pred_check_branch
        %282 = sbr.rel (%p279) target = $region32
      $region31: #{tpu_custom_call.1} parent=5 // pred_region
        %s283 = ssub.s32 %s24, 1
        %s284 = sand.u32 %s51, 1
        %s285 = scalar_lea.sflag [#allocation3], %s284
        %s286 = sand.u32 %s51, 1
        %s287 = smul.addr %s286, 8
        %s288 = scalar_lea.vmem [#allocation2], %s287
        // Predicated region
        $region33: #{tpu_custom_call.1} parent=31 // pred_check
          %p289 = pneg %p64
        $region34: #{tpu_custom_call.1} parent=31 // pred_check_branch
          %291 = sbr.rel (%p289) target = $region36
        $region35: #{tpu_custom_call.1} parent=31 // pred_region
          %293 = dma.done %s285, 128
        $region36: #{tpu_custom_call.1} parent=31 // pred_fallthru
          _
        %s294 = sand.u32 %s29, 1
        %s295 = scalar_lea.sflag [#allocation6], %s294
        %s296 = sand.u32 %s77, 1
        %s297 = smul.addr %s296, 8
        %s298 = scalar_lea.vmem [#allocation5], %s297
        // Predicated region
        $region37: #{tpu_custom_call.1} parent=31 // pred_check
          %p299 = pneg %p90
        $region38: #{tpu_custom_call.1} parent=31 // pred_check_branch
          %301 = sbr.rel (%p299) target = $region40
        $region39: #{tpu_custom_call.1} parent=31 // pred_region
          %303 = dma.done %s295, 128
        $region40: #{tpu_custom_call.1} parent=31 // pred_fallthru
          _
        %s304 = sand.u32 %s29, 1
        %s305 = scalar_lea.sflag [#allocation6], %s304
        %s306 = sand.u32 %s103, 1
        %s307 = smul.addr %s306, 8
        %s308 = scalar_lea.vmem [#allocation7], %s307
        // Predicated region
        $region41: #{tpu_custom_call.1} parent=31 // pred_check
          %p309 = pneg %p116
        $region42: #{tpu_custom_call.1} parent=31 // pred_check_branch
          %311 = sbr.rel (%p309) target = $region44
        $region43: #{tpu_custom_call.1} parent=31 // pred_region
          %313 = dma.done %s305, 128
        $region44: #{tpu_custom_call.1} parent=31 // pred_fallthru
          _
        %s314 = sand.u32 %s51, 1
        %s315 = scalar_lea.sflag [#allocation3], %s314
        %s316 = sand.u32 %s51, 1
        %s317 = smul.addr %s316, 8
        %s318 = scalar_lea.vmem [#allocation2], %s317
        %p319 = pneg %p64
        %p320 = pneg %p61
        %s321 = sand.u32 %s29, 1
        %s322 = scalar_lea.sflag [#allocation6], %s321
        %s323 = sand.u32 %s77, 1
        %s324 = smul.addr %s323, 8
        %s325 = scalar_lea.vmem [#allocation5], %s324
        %p326 = pneg %p90
        %p327 = pneg %p87
        %s328 = sand.u32 %s29, 1
        %s329 = scalar_lea.sflag [#allocation6], %s328
        %s330 = sand.u32 %s103, 1
        %s331 = smul.addr %s330, 8
        %s332 = scalar_lea.vmem [#allocation7], %s331
        %p333 = pneg %p116
        %p334 = pneg %p113
        %p335 = pneg %p144
        %p336 = pneg %p141
        %s337 = sand.u32 %s131, 1
        %s338 = scalar_lea.sflag [#allocation4], %s337
        %s339 = sand.u32 %s131, 1
        %s340 = smul.addr %s339, 8
        %s341 = scalar_lea.vmem [#allocation8], %s340
        %p342 = pneg %p172
        %p343 = pneg %p169
        %s344 = sand.u32 %s29, 1
        %s345 = scalar_lea.sflag [#allocation10], %s344
        %s346 = sand.u32 %s159, 1
        %s347 = smul.addr %s346, 8
        %s348 = scalar_lea.vmem [#allocation9], %s347
        %p349 = pneg %p200
        %p350 = pneg %p197
        %s351 = sand.u32 %s29, 1
        %s352 = scalar_lea.sflag [#allocation10], %s351
        %s353 = sand.u32 %s187, 1
        %s354 = smul.addr %s353, 8
        %s355 = scalar_lea.vmem [#allocation11], %s354
        %v356 = vld [vmem:[%s288] sm:$0xff]
        %v357 = vld [vmem:[%s298] sm:$0xff]
        %vm358 = vcmask 261120
        %v360 = vsel %vm358, %v356, 0
        %v363 = vsel %vm358, %v357, 0
        %365 = vmatpush.xpose.msra.mxu0 0.0
        %366 = vmatpush.xpose.msra.mxu0 0.0
        %367 = vmatpush.xpose.msra.mxu0 0.0
        %368 = vmatpush.xpose.msra.mxu0 0.0
        %369 = vmatpush.xpose.msra.mxu0 0.0
        %370 = vmatpush.xpose.msra.mxu0 0.0
        %371 = vmatpush.xpose.msra.mxu0 0.0
        %372 = vmatpush.xpose.msra.mxu0 0.0
        %373 = vmatpush.xpose.msra.mxu0 0.0
        %374 = vmatpush.xpose.msra.mxu0 0.0
        %375 = vmatpush.xpose.msra.mxu0 0.0
        %376 = vmatpush.xpose.msra.mxu0 0.0
        %377 = vmatpush.xpose.msra.mxu0 0.0
        %378 = vmatpush.xpose.msra.mxu0 0.0
        %379 = vmatpush.xpose.msra.mxu0 0.0
        %380 = vmatpush.xpose.msra.mxu0 %v363
        %381 = vmatmul.f32.gmra.mxu0 %v360
        %v382 = vpop.f32.mrf.mxu0
        %v383 = vadd.f32 0.0, %v382
        %384 = vdwg.mxu0
        %v385 = vmul.f32 %v383, 0.17677669
        %vm386 = vcmask 64512
        %v387 = vsel %vm386, %v385, -inf
        %388 = vmax.xlane.f32.xlu0 %v387
        %v389 = vpop.xlane.xlu0 %388
        %v390 = vsub.f32 %v385, %v389
        %v391 = vmul.f32 %v390, 1.442695
        %v392 = vpow.pop %v391
        %v393 = vsel %vm386, %v392, 0.0
        %394 = vadd.xlane.f32.xlu0 %v393
        %v395 = vpop.xlane.xlu0 %394
        %v396 = vrcp.pop %v395
        %v397 = vmul.f32 %v395, %v396
        %v398 = vsub.f32 1.0, %v397
        %v399 = vmul.f32 %v396, %v398
        %v400 = vadd.f32 %v396, %v399
        %vm401 = vweird.f32 %v395
        %vm402 = vweird.f32 %v396
        %vm403 = vmor %vm401, %vm402
        %v404 = vsel %vm403, %v396, %v400
        %v405 = vand.u32 2147483647, %v395
        %vm406 = vcmp.eq.f32.partialorder %v405, 8.507059e+37
        %v407 = vand.u32 %v395, 2147483648
        %v408 = vor.u32 1.1754944e-38, %v407
        %v409 = vsel %vm406, %v408, %v404
        %v410 = vmul.f32 %v392, %v409
        %v411 = vlog2.pop %v395
        %v412 = vmul.f32 %v411, 0.6931472
        %v413 = vsub.f32 %v390, %v412
        %414 = vst.msk [vmem:[%s355] sm:$0xff] %vm386, %v413
        %415 = vst.msk [vmem:[%s348] sm:$0xff] %vm386, %v410
        %v416 = vld [vmem:[%s308] sm:$0xff]
        %v418 = vsel %vm386, %v410, 0
        %420 = vmatpush.msra.mxu0 0.0
        %421 = vmatpush.msra.mxu0 0.0
        %422 = vmatpush.msra.mxu0 0.0
        %423 = vmatpush.msra.mxu0 0.0
        %424 = vmatpush.msra.mxu0 0.0
        %425 = vmatpush.msra.mxu0 0.0
        %426 = vmatpush.msra.mxu0 0.0
        %427 = vmatpush.msra.mxu0 0.0
        %428 = vmatpush.msra.mxu0 0.0
        %429 = vmatpush.msra.mxu0 0.0
        %430 = vmatpush.msra.mxu0 0.0
        %431 = vmatpush.msra.mxu0 0.0
        %432 = vmatpush.msra.mxu0 0.0
        %433 = vmatpush.msra.mxu0 0.0
        %434 = vmatpush.msra.mxu0 0.0
        %435 = vmatpush.msra.mxu0 %v416
        %436 = vmatmul.f32.gmra.mxu0 %v418
        %v437 = vpop.f32.mrf.mxu0
        %v438 = vadd.f32 0.0, %v437
        %439 = vdwg.mxu0
        %440 = vst.msk [vmem:[%s341] sm:$0xff] %vm358, %v438
        %s441 = sand.u32 %s131, 1
        %s442 = scalar_lea.sflag [#allocation4], %s441
        %s443 = sand.u32 %s131, 1
        %s444 = smul.addr %s443, 8
        %s445 = scalar_lea.vmem [#allocation8], %s444
        %s446 = sand.u32 %s29, 1
        %s447 = scalar_lea.sflag [#allocation10], %s446
        %s448 = sand.u32 %s159, 1
        %s449 = smul.addr %s448, 8
        %s450 = scalar_lea.vmem [#allocation9], %s449
        %s451 = sand.u32 %s29, 1
        %s452 = scalar_lea.sflag [#allocation10], %s451
        %s453 = sand.u32 %s187, 1
        %s454 = smul.addr %s453, 8
        %s455 = scalar_lea.vmem [#allocation11], %s454
        // Predicated region
        $region45: #{tpu_custom_call.1} parent=31 // pred_check
          %p456 = pneg %p141
        $region46: #{tpu_custom_call.1} parent=31 // pred_check_branch
          %458 = sbr.rel (%p456) target = $region48
        $region47: #{tpu_custom_call.1} parent=31 // pred_region
          %460 = vsyncadd %s442, 0
          %s461 = sadd.s32 %s34, %s33
          %s462 = smul.addr %s461, 8
          %s463 = scalar_lea.hbm %s3, %s462
          %s465 = sshll.u32 %s445, 4
          %s466 = int_to_ptr.vmem [resolvable:$true] %s465
          %s467 = sshll.u32 %s463, 4
          %s468 = int_to_ptr.hbm [resolvable:$true] %s467
          %470 = dma.vmem_to_hbm [thread:$0]  %s466, 128, %s468, %s442
        $region48: #{tpu_custom_call.1} parent=31 // pred_fallthru
          _
        // Predicated region
        $region49: #{tpu_custom_call.1} parent=31 // pred_check
          %p471 = pneg %p169
        $region50: #{tpu_custom_call.1} parent=31 // pred_check_branch
          %473 = sbr.rel (%p471) target = $region52
        $region51: #{tpu_custom_call.1} parent=31 // pred_region
          %475 = vsyncadd %s447, 0
          %s476 = sadd.s32 %s34, %s33
          %s477 = smul.addr %s476, 8
          %s478 = scalar_lea.hbm %s4, %s477
          %s480 = sshll.u32 %s450, 4
          %s481 = int_to_ptr.vmem [resolvable:$true] %s480
          %s482 = sshll.u32 %s478, 4
          %s483 = int_to_ptr.hbm [resolvable:$true] %s482
          %485 = dma.vmem_to_hbm [thread:$0]  %s481, 128, %s483, %s447
        $region52: #{tpu_custom_call.1} parent=31 // pred_fallthru
          _
        // Predicated region
        $region53: #{tpu_custom_call.1} parent=31 // pred_check
          %p486 = pneg %p197
        $region54: #{tpu_custom_call.1} parent=31 // pred_check_branch
          %488 = sbr.rel (%p486) target = $region56
        $region55: #{tpu_custom_call.1} parent=31 // pred_region
          %490 = vsyncadd %s452, 0
          %s491 = sadd.s32 %s34, %s33
          %s492 = smul.addr %s491, 8
          %s493 = scalar_lea.hbm %s5, %s492
          %s495 = sshll.u32 %s455, 4
          %s496 = int_to_ptr.vmem [resolvable:$true] %s495
          %s497 = sshll.u32 %s493, 4
          %s498 = int_to_ptr.hbm [resolvable:$true] %s497
          %500 = dma.vmem_to_hbm [thread:$0]  %s496, 128, %s498, %s452
        $region56: #{tpu_custom_call.1} parent=31 // pred_fallthru
          _
      $region32: #{tpu_custom_call.1} parent=5 // pred_fallthru
        _
      %p501 = scmp.le.s32.totalorder 2, %s24
      // Predicated region
      $region57: #{tpu_custom_call.1} parent=5 // pred_check
        %p502 = pneg %p501
      $region58: #{tpu_custom_call.1} parent=5 // pred_check_branch
        %504 = sbr.rel (%p502) target = $region60
      $region59: #{tpu_custom_call.1} parent=5 // pred_region
        %s505 = ssub.s32 %s24, 2
        // Predicated region
        $region61: #{tpu_custom_call.1} parent=59 // pred_check
          %p506 = pneg %p147
        $region62: #{tpu_custom_call.1} parent=59 // pred_check_branch
          %508 = sbr.rel (%p506) target = $region64
        $region63: #{tpu_custom_call.1} parent=59 // pred_region
          %s509 = sand.u32 %s132, 1
          %s510 = scalar_lea.sflag [#allocation4], %s509
          %s511 = sand.u32 %s132, 1
          %s512 = smul.addr %s511, 8
          %s513 = scalar_lea.vmem [#allocation8], %s512
          %515 = dma.done %s510, 128
        $region64: #{tpu_custom_call.1} parent=59 // pred_fallthru
          _
        // Predicated region
        $region65: #{tpu_custom_call.1} parent=59 // pred_check
          %p516 = pneg %p175
        $region66: #{tpu_custom_call.1} parent=59 // pred_check_branch
          %518 = sbr.rel (%p516) target = $region68
        $region67: #{tpu_custom_call.1} parent=59 // pred_region
          %s519 = sand.u32 %s30, 1
          %s520 = scalar_lea.sflag [#allocation10], %s519
          %s521 = sand.u32 %s160, 1
          %s522 = smul.addr %s521, 8
          %s523 = scalar_lea.vmem [#allocation9], %s522
          %525 = dma.done %s520, 128
        $region68: #{tpu_custom_call.1} parent=59 // pred_fallthru
          _
        // Predicated region
        $region69: #{tpu_custom_call.1} parent=59 // pred_check
          %p526 = pneg %p203
        $region70: #{tpu_custom_call.1} parent=59 // pred_check_branch
          %528 = sbr.rel (%p526) target = $region72
        $region71: #{tpu_custom_call.1} parent=59 // pred_region
          %s529 = sand.u32 %s30, 1
          %s530 = scalar_lea.sflag [#allocation10], %s529
          %s531 = sand.u32 %s188, 1
          %s532 = smul.addr %s531, 8
          %s533 = scalar_lea.vmem [#allocation11], %s532
          %535 = dma.done %s530, 128
        $region72: #{tpu_custom_call.1} parent=59 // pred_fallthru
          _
      $region60: #{tpu_custom_call.1} parent=5 // pred_fallthru
        _
    $region6: #{tpu_custom_call.1} parent=1 // loop_footer
      %s28 = sadd.s32 1, %s24
    $region7: #{tpu_custom_call.1} parent=1 // loop_footer_branch
      %23 = sbr.rel target = $region3
    $region8: #{tpu_custom_call.1} parent=1 // loop_exit
      _
    %536 = vsyncpa [#allocation3], 1
    %s537 = scalar_lea.sflag [#allocation3], 1
    %538 = vsyncpa %s537, 1
    %539 = vsyncpa [#allocation6], 1
    %s540 = scalar_lea.sflag [#allocation6], 1
    %541 = vsyncpa %s540, 1
    %542 = vsyncpa [#allocation4], 1
    %s543 = scalar_lea.sflag [#allocation4], 1
    %544 = vsyncpa %s543, 1
    %545 = vsyncpa [#allocation10], 1
    %s546 = scalar_lea.sflag [#allocation10], 1
    %547 = vsyncpa %s546, 1

</llo_original>
